<compile_context>
chip_gen: v7x
topology: tpu7x:2x2x1
jax: 0.10.0
libtpu: 0.0.40
codegen_flags: <defaults>
</compile_context>

<pallas_src>
import jax
import jax.numpy as jnp
from jax.experimental import pallas as pl
from jax.experimental.pallas import tpu as pltpu

LANES = 128      # lane width
MAX_TM = 512     # max sublane rows per grid step (block = 256 KiB f32)
NCORES = 2       # leading core-parallel grid axis (v7x megacore split)


def _cdiv(a, b):
    return -(-a // b)


def _round_up(a, m):
    return _cdiv(a, m) * m


def _bce_dice_partial_kernel(p_ref, t_ref, o_ref, acc_nll, acc_pt, acc_s):
    i = pl.program_id(1)

    @pl.when(i == 0)
    def _():
        acc_nll[...] = jnp.zeros_like(acc_nll)
        acc_pt[...] = jnp.zeros_like(acc_pt)
        acc_s[...] = jnp.zeros_like(acc_s)

    p = p_ref[...].astype(jnp.float32)
    t = t_ref[...].astype(jnp.float32)

    # PyTorch nn.BCELoss clamps log terms at -100.  With zero padding this
    # also makes padded elements contribute exactly 0 (0 * -100 = 0).
    log_p = jnp.maximum(jnp.log(p), jnp.float32(-100.0))
    log_1mp = jnp.maximum(jnp.log(1.0 - p), jnp.float32(-100.0))

    # Accumulate +log-likelihood (negation folded into the wrapper epilogue).
    acc_nll[...] += t * log_p + (1.0 - t) * log_1mp
    acc_pt[...] += p * t
    acc_s[...] += p + t          # sum(pred) + sum(truth), merged accumulator

    @pl.when(i == pl.num_programs(1) - 1)
    def _():
        # One sublane reduction per accumulator, once per core; the final
        # lane reduction happens in the JAX wrapper.
        o_ref[0:1, :] = jnp.sum(acc_nll[...], axis=0, keepdims=True)
        o_ref[1:2, :] = jnp.sum(acc_pt[...], axis=0, keepdims=True)
        o_ref[2:3, :] = jnp.sum(acc_s[...], axis=0, keepdims=True)


def bce_dice_loss2(pred, target):
    """Equivalent of BCEDiceLoss2.forward(input, target) -> scalar loss."""
    p = pred.reshape(-1)          # keep native dtype; cast inside the kernel
    t = target.reshape(-1)
    n = p.shape[0]

    r_raw = _cdiv(n, LANES)
    tm = min(MAX_TM, _round_up(r_raw, 8))
    tiles = _round_up(_cdiv(r_raw, tm), NCORES)
    rows = tiles * tm
    n_pad = rows * LANES
    pad = n_pad - n
    if pad:
        # Zero padding is exact (no mask stream needed) thanks to the -100
        # clamp; skipped entirely when shapes already line up.
        p = jnp.pad(p, (0, pad))
        t = jnp.pad(t, (0, pad))
    p = p.reshape(rows, LANES)
    t = t.reshape(rows, LANES)

    inner = tiles // NCORES
    in_spec = pl.BlockSpec((tm, LANES), lambda c, i: (c * inner + i, 0))
    out_spec = pl.BlockSpec((None, 3, LANES), lambda c, i: (c, 0, 0))

    partials = pl.pallas_call(
        _bce_dice_partial_kernel,
        out_shape=jax.ShapeDtypeStruct((NCORES, 3, LANES), jnp.float32),
        grid_spec=pltpu.PrefetchScalarGridSpec(
            num_scalar_prefetch=0,
            grid=(NCORES, inner),
            in_specs=[in_spec, in_spec],
            out_specs=out_spec,
            scratch_shapes=[pltpu.VMEM((tm, LANES), jnp.float32)] * 3,
        ),
        compiler_params=pltpu.CompilerParams(
            dimension_semantics=("parallel", "arbitrary")),
    )(p, t)

    sums = jnp.sum(partials, axis=(0, 2))          # (3,): nll, p*t, p+t
    bce_mean = -sums[0] / jnp.float32(n)           # static n, no mask count
    eps = jnp.float32(1e-05)
    dice_coef = (2.0 * sums[1] + eps) / (sums[2] + eps)
    # TODO(synk): PyTorch upcasts the final reduction to float64; TPU stays f32.
    return bce_mean + (jnp.float32(1.0) - dice_coef)


def _reference(pred, target):
    p = pred.reshape(-1).astype(jnp.float32)
    t = target.reshape(-1).astype(jnp.float32)
    log_p = jnp.maximum(jnp.log(p), -100.0)
    log_1mp = jnp.maximum(jnp.log(1.0 - p), -100.0)
    bce = jnp.mean(-(t * log_p + (1.0 - t) * log_1mp))
    eps = 1e-05
    dice = (2.0 * jnp.sum(p * t) + eps) / (jnp.sum(p) + jnp.sum(t) + eps)
    return bce + (1.0 - dice)


if __name__ == "__main__":
    key = jax.random.PRNGKey(0)
    k1, k2 = jax.random.split(key)
    # input: probabilities in (0,1) (NCHW), target: binary mask, same shape.
    x = jax.nn.sigmoid(jax.random.normal(k1, (2, 4, 16, 16), jnp.float32))
    y = (jax.random.uniform(k2, (2, 4, 16, 16)) > 0.5).astype(jnp.float32)

    loss = jax.block_until_ready(bce_dice_loss2(x, y))
    ref = _reference(x, y)
    assert jnp.allclose(loss, ref, rtol=1e-5, atol=1e-5), (loss, ref)
    print("KERNEL_OK")
</pallas_src>

<mosaic_0001>
module attributes {stable_mosaic.version = 11 : i64} {
  func.func @_bce_dice_partial_kernel(%arg0: i32, %arg1: i32, %arg2: memref<16x128xf32, #tpu.memory_space<vmem>>, %arg3: memref<16x128xf32, #tpu.memory_space<vmem>>, %arg4: memref<1x3x128xf32, #tpu.memory_space<vmem>>, %arg5: memref<16x128xf32, #tpu.memory_space<vmem>>, %arg6: memref<16x128xf32, #tpu.memory_space<vmem>>, %arg7: memref<16x128xf32, #tpu.memory_space<vmem>>) attributes {dimension_semantics = [#tpu.dimension_semantics<parallel>, #tpu.dimension_semantics<arbitrary>], iteration_bounds = array<i64: 2, 1>, scalar_prefetch = 0 : i64, scratch_operands = 3 : i64, tpu.core_type = #tpu.core_type<tc>, window_params = [{transform_indices = @transform_0, window_bounds = array<i64: 16, 128>}, {transform_indices = @transform_1, window_bounds = array<i64: 16, 128>}, {transform_indices = @transform_2, window_bounds = array<i64: 1, 3, 128>}]} {
    %c0_i32 = arith.constant 0 : i32
    %0 = arith.cmpi eq, %arg1, %c0_i32 : i32
    %1 = arith.extui %0 : i1 to i32
    %c0_i32_0 = arith.constant 0 : i32
    %2 = arith.cmpi ne, %1, %c0_i32_0 : i32
    scf.if %2 {
      %cst_21 = arith.constant 0.000000e+00 : f32
      %32 = vector.broadcast %cst_21 : f32 to vector<16x128xf32>
      %c0_22 = arith.constant 0 : index
      %c0_23 = arith.constant 0 : index
      %33 = vector.load %arg5[%c0_22, %c0_23] : memref<16x128xf32, #tpu.memory_space<vmem>>, vector<16x128xf32>
      tpu.vector_store %arg5[%c0_22, %c0_23], %32 {strides = array<i32>} : memref<16x128xf32, #tpu.memory_space<vmem>>, vector<16x128xf32>,
      %cst_24 = arith.constant 0.000000e+00 : f32
      %34 = vector.broadcast %cst_24 : f32 to vector<16x128xf32>
      %c0_25 = arith.constant 0 : index
      %c0_26 = arith.constant 0 : index
      %35 = vector.load %arg6[%c0_25, %c0_26] : memref<16x128xf32, #tpu.memory_space<vmem>>, vector<16x128xf32>
      tpu.vector_store %arg6[%c0_25, %c0_26], %34 {strides = array<i32>} : memref<16x128xf32, #tpu.memory_space<vmem>>, vector<16x128xf32>,
      %cst_27 = arith.constant 0.000000e+00 : f32
      %36 = vector.broadcast %cst_27 : f32 to vector<16x128xf32>
      %c0_28 = arith.constant 0 : index
      %c0_29 = arith.constant 0 : index
      %37 = vector.load %arg7[%c0_28, %c0_29] : memref<16x128xf32, #tpu.memory_space<vmem>>, vector<16x128xf32>
      tpu.vector_store %arg7[%c0_28, %c0_29], %36 {strides = array<i32>} : memref<16x128xf32, #tpu.memory_space<vmem>>, vector<16x128xf32>,
    } else {
    }
    %c0 = arith.constant 0 : index
    %c0_1 = arith.constant 0 : index
    %3 = vector.load %arg2[%c0, %c0_1] : memref<16x128xf32, #tpu.memory_space<vmem>>, vector<16x128xf32>
    %c0_2 = arith.constant 0 : index
    %c0_3 = arith.constant 0 : index
    %4 = vector.load %arg3[%c0_2, %c0_3] : memref<16x128xf32, #tpu.memory_space<vmem>>, vector<16x128xf32>
    %5 = math.log %3 : vector<16x128xf32>
    %cst = arith.constant -1.000000e+02 : f32
    %6 = vector.broadcast %cst : f32 to vector<16x128xf32>
    %7 = arith.maximumf %5, %6 : vector<16x128xf32>
    %cst_4 = arith.constant 1.000000e+00 : f32
    %8 = vector.broadcast %cst_4 : f32 to vector<16x128xf32>
    %9 = arith.subf %8, %3 : vector<16x128xf32>
    %10 = math.log %9 : vector<16x128xf32>
    %cst_5 = arith.constant -1.000000e+02 : f32
    %11 = vector.broadcast %cst_5 : f32 to vector<16x128xf32>
    %12 = arith.maximumf %10, %11 : vector<16x128xf32>
    %c0_6 = arith.constant 0 : index
    %c0_7 = arith.constant 0 : index
    %13 = vector.load %arg5[%c0_6, %c0_7] : memref<16x128xf32, #tpu.memory_space<vmem>>, vector<16x128xf32>
    %14 = arith.mulf %4, %7 : vector<16x128xf32>
    %cst_8 = arith.constant 1.000000e+00 : f32
    %15 = vector.broadcast %cst_8 : f32 to vector<16x128xf32>
    %16 = arith.subf %15, %4 : vector<16x128xf32>
    %17 = arith.mulf %16, %12 : vector<16x128xf32>
    %18 = arith.addf %14, %17 : vector<16x128xf32>
    %19 = arith.addf %13, %18 : vector<16x128xf32>
    %c0_9 = arith.constant 0 : index
    %c0_10 = arith.constant 0 : index
    %20 = vector.load %arg5[%c0_9, %c0_10] : memref<16x128xf32, #tpu.memory_space<vmem>>, vector<16x128xf32>
    tpu.vector_store %arg5[%c0_9, %c0_10], %19 {strides = array<i32>} : memref<16x128xf32, #tpu.memory_space<vmem>>, vector<16x128xf32>,
    %c0_11 = arith.constant 0 : index
    %c0_12 = arith.constant 0 : index
    %21 = vector.load %arg6[%c0_11, %c0_12] : memref<16x128xf32, #tpu.memory_space<vmem>>, vector<16x128xf32>
    %22 = arith.mulf %3, %4 : vector<16x128xf32>
    %23 = arith.addf %21, %22 : vector<16x128xf32>
    %c0_13 = arith.constant 0 : index
    %c0_14 = arith.constant 0 : index
    %24 = vector.load %arg6[%c0_13, %c0_14] : memref<16x128xf32, #tpu.memory_space<vmem>>, vector<16x128xf32>
    tpu.vector_store %arg6[%c0_13, %c0_14], %23 {strides = array<i32>} : memref<16x128xf32, #tpu.memory_space<vmem>>, vector<16x128xf32>,
    %c0_15 = arith.constant 0 : index
    %c0_16 = arith.constant 0 : index
    %25 = vector.load %arg7[%c0_15, %c0_16] : memref<16x128xf32, #tpu.memory_space<vmem>>, vector<16x128xf32>
    %26 = arith.addf %3, %4 : vector<16x128xf32>
    %27 = arith.addf %25, %26 : vector<16x128xf32>
    %c0_17 = arith.constant 0 : index
    %c0_18 = arith.constant 0 : index
    %28 = vector.load %arg7[%c0_17, %c0_18] : memref<16x128xf32, #tpu.memory_space<vmem>>, vector<16x128xf32>
    tpu.vector_store %arg7[%c0_17, %c0_18], %27 {strides = array<i32>} : memref<16x128xf32, #tpu.memory_space<vmem>>, vector<16x128xf32>,
    %c0_i32_19 = arith.constant 0 : i32
    %29 = arith.cmpi eq, %arg1, %c0_i32_19 : i32
    %30 = arith.extui %29 : i1 to i32
    %c0_i32_20 = arith.constant 0 : i32
    %31 = arith.cmpi ne, %30, %c0_i32_20 : i32
    scf.if %31 {
      %c0_21 = arith.constant 0 : index
      %c0_22 = arith.constant 0 : index
      %32 = vector.load %arg5[%c0_21, %c0_22] : memref<16x128xf32, #tpu.memory_space<vmem>>, vector<16x128xf32>
      %cst_23 = arith.constant dense<0.000000e+00> : vector<128xf32>
      %33 = vector.multi_reduction <add>, %32, %cst_23 [0] : vector<16x128xf32> to vector<128xf32>
      %34 = vector.shape_cast %33 : vector<128xf32> to vector<1x128xf32>
      %c0_24 = arith.constant 0 : index
      %c0_25 = arith.constant 0 : index
      %c0_26 = arith.constant 0 : index
      %35 = vector.load %arg4[%c0_24, %c0_25, %c0_26] : memref<1x3x128xf32, #tpu.memory_space<vmem>>, vector<1x1x128xf32>
      %36 = vector.shape_cast %35 : vector<1x1x128xf32> to vector<1x128xf32>
      %37 = vector.shape_cast %34 : vector<1x128xf32> to vector<1x1x128xf32>
      tpu.vector_store %arg4[%c0_24, %c0_25, %c0_26], %37 {strides = array<i32>} : memref<1x3x128xf32, #tpu.memory_space<vmem>>, vector<1x1x128xf32>,
      %c0_27 = arith.constant 0 : index
      %c0_28 = arith.constant 0 : index
      %38 = vector.load %arg6[%c0_27, %c0_28] : memref<16x128xf32, #tpu.memory_space<vmem>>, vector<16x128xf32>
      %cst_29 = arith.constant dense<0.000000e+00> : vector<128xf32>
      %39 = vector.multi_reduction <add>, %38, %cst_29 [0] : vector<16x128xf32> to vector<128xf32>
      %40 = vector.shape_cast %39 : vector<128xf32> to vector<1x128xf32>
      %c0_30 = arith.constant 0 : index
      %c1 = arith.constant 1 : index
      %c0_31 = arith.constant 0 : index
      %41 = vector.load %arg4[%c0_30, %c1, %c0_31] : memref<1x3x128xf32, #tpu.memory_space<vmem>>, vector<1x1x128xf32>
      %42 = vector.shape_cast %41 : vector<1x1x128xf32> to vector<1x128xf32>
      %43 = vector.shape_cast %40 : vector<1x128xf32> to vector<1x1x128xf32>
      tpu.vector_store %arg4[%c0_30, %c1, %c0_31], %43 {strides = array<i32>} : memref<1x3x128xf32, #tpu.memory_space<vmem>>, vector<1x1x128xf32>,
      %c0_32 = arith.constant 0 : index
      %c0_33 = arith.constant 0 : index
      %44 = vector.load %arg7[%c0_32, %c0_33] : memref<16x128xf32, #tpu.memory_space<vmem>>, vector<16x128xf32>
      %cst_34 = arith.constant dense<0.000000e+00> : vector<128xf32>
      %45 = vector.multi_reduction <add>, %44, %cst_34 [0] : vector<16x128xf32> to vector<128xf32>
      %46 = vector.shape_cast %45 : vector<128xf32> to vector<1x128xf32>
      %c0_35 = arith.constant 0 : index
      %c2 = arith.constant 2 : index
      %c0_36 = arith.constant 0 : index
      %47 = vector.load %arg4[%c0_35, %c2, %c0_36] : memref<1x3x128xf32, #tpu.memory_space<vmem>>, vector<1x1x128xf32>
      %48 = vector.shape_cast %47 : vector<1x1x128xf32> to vector<1x128xf32>
      %49 = vector.shape_cast %46 : vector<1x128xf32> to vector<1x1x128xf32>
      tpu.vector_store %arg4[%c0_35, %c2, %c0_36], %49 {strides = array<i32>} : memref<1x3x128xf32, #tpu.memory_space<vmem>>, vector<1x1x128xf32>,
    } else {
    }
    return
  }
  func.func @transform_0(%arg0: i32, %arg1: i32) -> (i32, i32) {
    %c1_i32 = arith.constant 1 : i32
    %0 = arith.muli %arg0, %c1_i32 : i32
    %1 = arith.addi %0, %arg1 : i32
    %c0_i32 = arith.constant 0 : i32
    %c0_i32_0 = arith.constant 0 : i32
    return %1, %c0_i32 : i32, i32
  }
  func.func @transform_1(%arg0: i32, %arg1: i32) -> (i32, i32) {
    %c1_i32 = arith.constant 1 : i32
    %0 = arith.muli %arg0, %c1_i32 : i32
    %1 = arith.addi %0, %arg1 : i32
    %c0_i32 = arith.constant 0 : i32
    %c0_i32_0 = arith.constant 0 : i32
    return %1, %c0_i32 : i32, i32
  }
  func.func @transform_2(%arg0: i32, %arg1: i32) -> (i32, i32, i32) {
    %c0_i32 = arith.constant 0 : i32
    %c0_i32_0 = arith.constant 0 : i32
    %c0_i32_1 = arith.constant 0 : i32
    return %arg0, %c0_i32, %c0_i32_0 : i32, i32, i32
  }
}

</mosaic_0001>

<llo_original>
// kernel: tpu_custom_call.1
$region0: #{tpu_custom_call.1}
  #allocation0 [shape = 'u32[]', space=smem, size = 0x4, offset = 0x4, fixed_abs, tag = 'smem constant byte address 0x4 - core index']
  #allocation1 [shape = 'u32[144,128]{1,0:T(1,128)}', space=vmem, size = 0x12000, scoped, tag = 'internal scratch']
  #allocation2 [shape = 'f32[16,128]{1,0:T(8,128)}', space=vmem, size = 0x2000, scoped, tag = 'scratch operand']
  #allocation3 [shape = 'f32[16,128]{1,0:T(8,128)}', space=vmem, size = 0x2000, scoped, tag = 'scratch operand']
  #allocation4 [shape = 'f32[16,128]{1,0:T(8,128)}', space=vmem, size = 0x2000, scoped, tag = 'scratch operand']
  %s0 = inlined_call_operand.hbm [shape: f32[32,128], index: 0, kind: input, shape index: {}]
  %s1 = inlined_call_operand.hbm [shape: f32[32,128], index: 1, kind: input, shape index: {}]
  %s2 = inlined_call_operand.vmem [shape: f32[2,3,128], index: 2, kind: output, shape index: {}]
  %s3 = sld [smem:[#allocation0]]
  $region57: #{tpu_custom_call.1} parent=0
    _
  %s5 = ssub.s32 1, %s3
  %s6 = scalar_select 0, %s5, %s3
  $region1: #{tpu_custom_call.1} parent=0
    #allocation5 [shape = 'u8[16384]{0}', space=vmem, size = 0x4000, scoped, tag = 'input window, operand 0']
    #allocation6 [shape = 's32[2]{0}', space=sflag, size = 0x8, scoped, tag = 'scoped memory for tpu_custom_call.1']
    #allocation7 [shape = 'u8[16384]{0}', space=vmem, size = 0x4000, scoped, tag = 'input window, operand 1']
    #allocation8 [shape = 's32[2]{0}', space=sflag, size = 0x8, scoped, tag = 'scoped memory for tpu_custom_call.1']
    %7 = vsyncpa [#allocation6], 0
    %s8 = scalar_lea.sflag [#allocation6], 1
    %9 = vsyncpa %s8, 0
    %10 = vsyncpa [#allocation8], 0
    %s11 = scalar_lea.sflag [#allocation8], 1
    %12 = vsyncpa %s11, 0
    loop: start=0, step=1, limit=4
    $region2: #{tpu_custom_call.1} parent=1 // loop_pre_header
      _
    $region3: #{tpu_custom_call.1} parent=1 // loop_header
      %s14 = sphi 0, %s18
      %p15 = scmp.ge.s32.totalorder %s14, 4
      %s21 = sphi 0, %s33
      %s22 = sphi 0, %s29
      %s23 = sphi 0, %s21
      %s24 = sphi 0, %s22
      %s25 = sphi 0, %s23
      %s26 = sphi 0, %s24
      %s38 = sphi 0, %s40
      %s41 = sphi 0, %s38
      %s42 = sphi 0, %s41
      %s58 = sphi 0, %s42
      %s66 = sphi 0, %s68
      %s69 = sphi 0, %s66
      %s70 = sphi 0, %s69
      %s86 = sphi 0, %s70
      %s92 = sphi 0, %s94
      %s95 = sphi 0, %s92
      %s96 = sphi 0, %s95
      %s112 = sphi 0, %s96
    $region4: #{tpu_custom_call.1} parent=1 // loop_header_branch
      %17 = sbr.rel (%p15) target = $region8
    $region5: #{tpu_custom_call.1} parent=1 // loop_body
      %s19 = ssub.s32 %s14, 1
      %s20 = ssub.s32 %s14, 2
      %s27 = sadd.s32 1, %s22
      %p28 = scmp.ge.s32.totalorder %s27, 1
      %s29 = scalar_select %p28, 0, %s27
      %s30 = sadd.s32 1, %s21
      %s31 = scalar_select %p28, %s30, %s21
      %p32 = scmp.ge.s32.totalorder %s31, 2
      %s33 = scalar_select %p32, 0, %s31
      %s34 = sadd.s32 %s21, %s22
      %s35 = sadd.s32 %s33, %s29
      %s36 = ssub.s32 %s34, %s35
      %p37 = scmp.eq.s32.totalorder %s36, 0
      %s39 = sadd.s32 %s38, 1
      %s40 = scalar_select %p37, %s38, %s39
      %p43 = pneg %p37
      %p44 = scmp.eq.s32.totalorder %s14, 1
      %p45 = por %p43, %p44
      %p46 = scmp.ne.s32.totalorder %s38, %s41
      %p47 = scmp.eq.s32.totalorder %s14, 0
      %p48 = por %p46, %p47
      %p49 = scmp.ne.s32.totalorder %s38, %s41
      %p50 = scmp.eq.s32.totalorder %s19, 1
      %p51 = por %p49, %p50
      %p52 = scmp.ne.s32.totalorder %s41, %s42
      %p53 = scmp.eq.s32.totalorder %s19, 0
      %p54 = por %p52, %p53
      %p55 = scmp.ne.s32.totalorder %s41, %s42
      %p56 = scmp.eq.s32.totalorder %s20, 1
      %p57 = por %p55, %p56
      %p59 = scmp.ne.s32.totalorder %s42, %s58
      %p60 = scmp.eq.s32.totalorder %s20, 0
      %p61 = por %p59, %p60
      %s62 = sadd.s32 %s21, %s22
      %s63 = sadd.s32 %s33, %s29
      %s64 = ssub.s32 %s62, %s63
      %p65 = scmp.eq.s32.totalorder %s64, 0
      %s67 = sadd.s32 %s66, 1
      %s68 = scalar_select %p65, %s66, %s67
      %p71 = pneg %p65
      %p72 = scmp.eq.s32.totalorder %s14, 1
      %p73 = por %p71, %p72
      %p74 = scmp.ne.s32.totalorder %s66, %s69
      %p75 = scmp.eq.s32.totalorder %s14, 0
      %p76 = por %p74, %p75
      %p77 = scmp.ne.s32.totalorder %s66, %s69
      %p78 = scmp.eq.s32.totalorder %s19, 1
      %p79 = por %p77, %p78
      %p80 = scmp.ne.s32.totalorder %s69, %s70
      %p81 = scmp.eq.s32.totalorder %s19, 0
      %p82 = por %p80, %p81
      %p83 = scmp.ne.s32.totalorder %s69, %s70
      %p84 = scmp.eq.s32.totalorder %s20, 1
      %p85 = por %p83, %p84
      %p87 = scmp.ne.s32.totalorder %s70, %s86
      %p88 = scmp.eq.s32.totalorder %s20, 0
      %p89 = por %p87, %p88
      %s90 = ssub.s32 %s21, %s33
      %p91 = scmp.eq.s32.totalorder %s90, 0
      %s93 = sadd.s32 %s92, 1
      %s94 = scalar_select %p91, %s92, %s93
      %p97 = pneg %p91
      %p98 = scmp.eq.s32.totalorder %s14, 1
      %p99 = por %p97, %p98
      %p100 = scmp.ne.s32.totalorder %s92, %s95
      %p101 = scmp.eq.s32.totalorder %s14, 0
      %p102 = por %p100, %p101
      %p103 = scmp.ne.s32.totalorder %s92, %s95
      %p104 = scmp.eq.s32.totalorder %s19, 1
      %p105 = por %p103, %p104
      %p106 = scmp.ne.s32.totalorder %s95, %s96
      %p107 = scmp.eq.s32.totalorder %s19, 0
      %p108 = por %p106, %p107
      %p109 = scmp.ne.s32.totalorder %s95, %s96
      %p110 = scmp.eq.s32.totalorder %s20, 1
      %p111 = por %p109, %p110
      %p113 = scmp.ne.s32.totalorder %s96, %s112
      %p114 = scmp.eq.s32.totalorder %s20, 0
      %p115 = por %p113, %p114
      %p116 = scmp.le.s32.totalorder 1, %s14
      %p117 = scmp.lt.s32.totalorder %s14, 3
      %p118 = pnand %p116, %p117
      %p119 = pneg %p118
      // Predicated region
      $region9: #{tpu_custom_call.1} parent=5 // pred_check
        _
      $region10: #{tpu_custom_call.1} parent=5 // pred_check_branch
        %121 = sbr.rel (%p118) target = $region12
      $region11: #{tpu_custom_call.1} parent=5 // pred_region
        %s122 = ssub.s32 %s14, 1
      $region12: #{tpu_custom_call.1} parent=5 // pred_fallthru
        _
      %p123 = scmp.lt.s32.totalorder %s14, 2
      // Predicated region
      $region13: #{tpu_custom_call.1} parent=5 // pred_check
        %p124 = pneg %p123
      $region14: #{tpu_custom_call.1} parent=5 // pred_check_branch
        %126 = sbr.rel (%p124) target = $region16
      $region15: #{tpu_custom_call.1} parent=5 // pred_region
        // Predicated region
        $region17: #{tpu_custom_call.1} parent=15 // pred_check
          %p127 = pneg %p48
        $region18: #{tpu_custom_call.1} parent=15 // pred_check_branch
          %129 = sbr.rel (%p127) target = $region20
        $region19: #{tpu_custom_call.1} parent=15 // pred_region
          %s130 = sand.u32 %s38, 1
          %s131 = scalar_lea.sflag [#allocation6], %s130
          %s132 = sand.u32 %s38, 1
          %s133 = smul.addr %s132, 16
          %s134 = scalar_lea.vmem [#allocation5], %s133
          %s135 = sadd.s32 %s21, %s22
          %s136 = smul.u32 2, %s135
          %s138 = ssub.s32 256, 256
          %139 = vsyncadd %s131, %s138
          %s140 = smul.addr %s136, 128
          %s141 = scalar_lea.hbm %s0, %s140
          %s142 = sshll.u32 %s134, 4
          %s143 = int_to_ptr.vmem [resolvable:$true] %s142
          %148 = dma.hbm_to_vmem [thread:$0]  %s141, 256, %s143, %s131, 128, 128, 8
        $region20: #{tpu_custom_call.1} parent=15 // pred_fallthru
          _
        // Predicated region
        $region21: #{tpu_custom_call.1} parent=15 // pred_check
          %p149 = pneg %p76
        $region22: #{tpu_custom_call.1} parent=15 // pred_check_branch
          %151 = sbr.rel (%p149) target = $region24
        $region23: #{tpu_custom_call.1} parent=15 // pred_region
          %s152 = sand.u32 %s66, 1
          %s153 = scalar_lea.sflag [#allocation8], %s152
          %s154 = sand.u32 %s66, 1
          %s155 = smul.addr %s154, 16
          %s156 = scalar_lea.vmem [#allocation7], %s155
          %s157 = sadd.s32 %s21, %s22
          %s158 = smul.u32 2, %s157
          %s160 = ssub.s32 256, 256
          %161 = vsyncadd %s153, %s160
          %s162 = smul.addr %s158, 128
          %s163 = scalar_lea.hbm %s1, %s162
          %s164 = sshll.u32 %s156, 4
          %s165 = int_to_ptr.vmem [resolvable:$true] %s164
          %170 = dma.hbm_to_vmem [thread:$0]  %s163, 256, %s165, %s153, 128, 128, 8
        $region24: #{tpu_custom_call.1} parent=15 // pred_fallthru
          _
      $region16: #{tpu_custom_call.1} parent=5 // pred_fallthru
        _
      %p171 = scmp.le.s32.totalorder 1, %s14
      %p172 = scmp.lt.s32.totalorder %s14, 3
      %p173 = pnand %p171, %p172
      %p174 = pneg %p173
      // Predicated region
      $region25: #{tpu_custom_call.1} parent=5 // pred_check
        _
      $region26: #{tpu_custom_call.1} parent=5 // pred_check_branch
        %176 = sbr.rel (%p173) target = $region28
      $region27: #{tpu_custom_call.1} parent=5 // pred_region
        %s177 = ssub.s32 %s14, 1
        %s178 = sand.u32 %s41, 1
        %s179 = scalar_lea.sflag [#allocation6], %s178
        %s180 = sand.u32 %s41, 1
        %s181 = smul.addr %s180, 16
        %s182 = scalar_lea.vmem [#allocation5], %s181
        // Predicated region
        $region29: #{tpu_custom_call.1} parent=27 // pred_check
          %p183 = pneg %p54
        $region30: #{tpu_custom_call.1} parent=27 // pred_check_branch
          %185 = sbr.rel (%p183) target = $region32
        $region31: #{tpu_custom_call.1} parent=27 // pred_region
          %186 = dma.done %s179, 256
        $region32: #{tpu_custom_call.1} parent=27 // pred_fallthru
          _
        %s187 = sand.u32 %s69, 1
        %s188 = scalar_lea.sflag [#allocation8], %s187
        %s189 = sand.u32 %s69, 1
        %s190 = smul.addr %s189, 16
        %s191 = scalar_lea.vmem [#allocation7], %s190
        // Predicated region
        $region33: #{tpu_custom_call.1} parent=27 // pred_check
          %p192 = pneg %p82
        $region34: #{tpu_custom_call.1} parent=27 // pred_check_branch
          %194 = sbr.rel (%p192) target = $region36
        $region35: #{tpu_custom_call.1} parent=27 // pred_region
          %195 = dma.done %s188, 256
        $region36: #{tpu_custom_call.1} parent=27 // pred_fallthru
          _
        %s196 = sand.u32 %s41, 1
        %s197 = scalar_lea.sflag [#allocation6], %s196
        %s198 = sand.u32 %s41, 1
        %s199 = smul.addr %s198, 16
        %s200 = scalar_lea.vmem [#allocation5], %s199
        %p201 = pneg %p54
        %p202 = pneg %p51
        %s203 = sand.u32 %s69, 1
        %s204 = scalar_lea.sflag [#allocation8], %s203
        %s205 = sand.u32 %s69, 1
        %s206 = smul.addr %s205, 16
        %s207 = scalar_lea.vmem [#allocation7], %s206
        %p208 = pneg %p82
        %p209 = pneg %p79
        %p210 = pneg %p108
        %p211 = pneg %p105
        %p212 = scmp.lt.s32.totalorder %s23, 1
        %s213 = scalar_select %p212, %s23, 1
        %s214 = smul.addr %s213, 4
        %s215 = scalar_lea.vmem %s2, %s214
        %s216 = sadd.s32 %s23, %s24
        %s217 = smul.u32 2, %s216
        %s218 = sadd.s32 %s23, %s24
        %s219 = smul.u32 2, %s218
        %p220 = scmp.lt.s32.totalorder %s23, 1
        %s221 = scalar_select %p220, %s23, 1
        %s222 = smul.addr %s221, 4
        %s223 = scalar_lea.vmem %s2, %s222
        %p224 = scmp.eq.s32.totalorder %s24, 0
        // Predicated region
        $region37: #{tpu_custom_call.1} parent=27 // pred_check
          %p225 = pneg %p224
        $region38: #{tpu_custom_call.1} parent=27 // pred_check_branch
          %227 = sbr.rel (%p225) target = $region40
        $region39: #{tpu_custom_call.1} parent=27 // pred_region
          %228 = vst [vmem:[#allocation2] sm:$0xff] 0.0
          %229 = vst [vmem:[#allocation2 + $0x8] sm:$0xff] 0.0
          %230 = vst [vmem:[#allocation3] sm:$0xff] 0.0
          %231 = vst [vmem:[#allocation3 + $0x8] sm:$0xff] 0.0
          %232 = vst [vmem:[#allocation4] sm:$0xff] 0.0
          %233 = vst [vmem:[#allocation4 + $0x8] sm:$0xff] 0.0
        $region40: #{tpu_custom_call.1} parent=27 // pred_fallthru
          _
        %v234 = vld [vmem:[%s182] sm:$0xff]
        %v235 = vld [vmem:[%s182 + $0x8] sm:$0xff]
        %v236 = vld [vmem:[%s191] sm:$0xff]
        %v237 = vld [vmem:[%s191 + $0x8] sm:$0xff]
        %v238 = vlog2.pop %v234
        %v239 = vmul.f32 %v238, 0.6931472
        %v240 = vlog2.pop %v235
        %v241 = vmul.f32 %v240, 0.6931472
        %v242 = vmax.f32 %v239, -100.0
        %v243 = vmax.f32 %v241, -100.0
        %v244 = vsub.f32 1.0, %v234
        %v245 = vsub.f32 1.0, %v235
        %v246 = vlog2.pop %v244
        %v247 = vmul.f32 %v246, 0.6931472
        %v248 = vlog2.pop %v245
        %v249 = vmul.f32 %v248, 0.6931472
        %v250 = vmax.f32 %v247, -100.0
        %v251 = vmax.f32 %v249, -100.0
        %v252 = vld [vmem:[#allocation2] sm:$0xff]
        %v253 = vld [vmem:[#allocation2 + $0x8] sm:$0xff]
        %v254 = vmul.f32 %v236, %v242
        %v255 = vmul.f32 %v237, %v243
        %v256 = vsub.f32 1.0, %v236
        %v257 = vsub.f32 1.0, %v237
        %v258 = vmul.f32 %v256, %v250
        %v259 = vmul.f32 %v257, %v251
        %v260 = vadd.f32 %v254, %v258
        %v261 = vadd.f32 %v255, %v259
        %v262 = vadd.f32 %v252, %v260
        %v263 = vadd.f32 %v253, %v261
        %264 = vst [vmem:[#allocation2] sm:$0xff] %v262
        %265 = vst [vmem:[#allocation2 + $0x8] sm:$0xff] %v263
        %v266 = vld [vmem:[#allocation3] sm:$0xff]
        %v267 = vld [vmem:[#allocation3 + $0x8] sm:$0xff]
        %v268 = vmul.f32 %v234, %v236
        %v269 = vmul.f32 %v235, %v237
        %v270 = vadd.f32 %v266, %v268
        %v271 = vadd.f32 %v267, %v269
        %272 = vst [vmem:[#allocation3] sm:$0xff] %v270
        %273 = vst [vmem:[#allocation3 + $0x8] sm:$0xff] %v271
        %v274 = vld [vmem:[#allocation4] sm:$0xff]
        %v275 = vld [vmem:[#allocation4 + $0x8] sm:$0xff]
        %v276 = vadd.f32 %v234, %v236
        %v277 = vadd.f32 %v235, %v237
        %v278 = vadd.f32 %v274, %v276
        %v279 = vadd.f32 %v275, %v277
        %280 = vst [vmem:[#allocation4] sm:$0xff] %v278
        %281 = vst [vmem:[#allocation4 + $0x8] sm:$0xff] %v279
        // Predicated region
        $region41: #{tpu_custom_call.1} parent=27 // pred_check
          %p282 = pneg %p224
        $region42: #{tpu_custom_call.1} parent=27 // pred_check_branch
          %284 = sbr.rel (%p282) target = $region44
        $region43: #{tpu_custom_call.1} parent=27 // pred_region
          %v285 = vld [vmem:[#allocation2] sm:$0xff]
          %v286 = vld [vmem:[#allocation2 + $0x8] sm:$0xff]
          %v287 = vadd.f32 %v285, %v286
          %v288 = vrot.slane %v287, 4
          %v289 = vadd.f32 %v287, %v288
          %v290 = vrot.slane %v289, 2
          %v291 = vadd.f32 %v289, %v290
          %v292 = vrot.slane %v291, 1
          %v293 = vadd.f32 %v291, %v292
          %294 = vst [vmem:[%s223] sm:$0x1] %v293
          %v295 = vld [vmem:[#allocation3] sm:$0xff]
          %v296 = vld [vmem:[#allocation3 + $0x8] sm:$0xff]
          %v297 = vadd.f32 %v295, %v296
          %v298 = vrot.slane %v297, 4
          %v299 = vadd.f32 %v297, %v298
          %v300 = vrot.slane %v299, 2
          %v301 = vadd.f32 %v299, %v300
          %v302 = vrot.slane %v301, 1
          %v303 = vadd.f32 %v301, %v302
          %304 = vst [vmem:[%s223 + $0x1] sm:$0x1] %v303
          %v305 = vld [vmem:[#allocation4] sm:$0xff]
          %v306 = vld [vmem:[#allocation4 + $0x8] sm:$0xff]
          %v307 = vadd.f32 %v305, %v306
          %v308 = vrot.slane %v307, 4
          %v309 = vadd.f32 %v307, %v308
          %v310 = vrot.slane %v309, 2
          %v311 = vadd.f32 %v309, %v310
          %v312 = vrot.slane %v311, 1
          %v313 = vadd.f32 %v311, %v312
          %314 = vst [vmem:[%s223 + $0x2] sm:$0x1] %v313
        $region44: #{tpu_custom_call.1} parent=27 // pred_fallthru
          _
        %p315 = scmp.lt.s32.totalorder %s23, 1
        %s316 = scalar_select %p315, %s23, 1
        %s317 = smul.addr %s316, 4
        %s318 = scalar_lea.vmem %s2, %s317
        // Predicated region
        $region45: #{tpu_custom_call.1} parent=27 // pred_check
          %p319 = pneg %p105
        $region46: #{tpu_custom_call.1} parent=27 // pred_check_branch
          %321 = sbr.rel (%p319) target = $region48
        $region47: #{tpu_custom_call.1} parent=27 // pred_region
          _
        $region48: #{tpu_custom_call.1} parent=27 // pred_fallthru
          _
      $region28: #{tpu_custom_call.1} parent=5 // pred_fallthru
        _
      %p322 = scmp.le.s32.totalorder 2, %s14
      // Predicated region
      $region49: #{tpu_custom_call.1} parent=5 // pred_check
        %p323 = pneg %p322
      $region50: #{tpu_custom_call.1} parent=5 // pred_check_branch
        %325 = sbr.rel (%p323) target = $region52
      $region51: #{tpu_custom_call.1} parent=5 // pred_region
        %s326 = ssub.s32 %s14, 2
        // Predicated region
        $region53: #{tpu_custom_call.1} parent=51 // pred_check
          %p327 = pneg %p111
        $region54: #{tpu_custom_call.1} parent=51 // pred_check_branch
          %329 = sbr.rel (%p327) target = $region56
        $region55: #{tpu_custom_call.1} parent=51 // pred_region
          %p330 = scmp.lt.s32.totalorder %s25, 1
          %s331 = scalar_select %p330, %s25, 1
          %s332 = smul.addr %s331, 4
          %s333 = scalar_lea.vmem %s2, %s332
        $region56: #{tpu_custom_call.1} parent=51 // pred_fallthru
          _
      $region52: #{tpu_custom_call.1} parent=5 // pred_fallthru
        _
    $region6: #{tpu_custom_call.1} parent=1 // loop_footer
      %s18 = sadd.s32 1, %s14
    $region7: #{tpu_custom_call.1} parent=1 // loop_footer_branch
      %13 = sbr.rel target = $region3
    $region8: #{tpu_custom_call.1} parent=1 // loop_exit
      _
    %334 = vsyncpa [#allocation6], 1
    %s335 = scalar_lea.sflag [#allocation6], 1
    %336 = vsyncpa %s335, 1
    %337 = vsyncpa [#allocation8], 1
    %s338 = scalar_lea.sflag [#allocation8], 1
    %339 = vsyncpa %s338, 1

</llo_original>
